<compile_context>
chip_gen: v7x
topology: tpu7x:2x2x1
jax: 0.10.0
libtpu: 0.0.40
codegen_flags: <defaults>
</compile_context>

<pallas_src>
import functools

import jax
import jax.numpy as jnp
from jax.experimental import pallas as pl
from jax.experimental.pallas import tpu as pltpu


def _ensemble_matmul_kernel(x_ref, w_ref, b_ref, o_ref, acc_ref, *, inv_v):
    # x_ref: (tm, tk)  bf16 slab of [B, V*D]
    # w_ref: (tk, tn)  bf16 slab of [V*D, H]
    # b_ref: (1,  tn)  f32 mean-over-views bias row
    # o_ref: (tm, tn)  output tile in the final output dtype
    # acc_ref: (tm, tn) f32 accumulator scratch (persists across the k axis)
    k = pl.program_id(2)

    @pl.when(k == 0)
    def _():
        acc_ref[...] = jnp.zeros_like(acc_ref)

    acc_ref[...] += jnp.dot(
        x_ref[...], w_ref[...], preferred_element_type=jnp.float32
    )

    @pl.when(k == pl.num_programs(2) - 1)
    def _():
        # static 1/V scale + one bias add + cast to the output dtype in-kernel
        o_ref[...] = (acc_ref[...] * inv_v + b_ref[...]).astype(o_ref.dtype)


def _round_up(x, m):
    return (x + m - 1) // m * m


def multi_view_forward(
    x_bvd,
    weights_vdh,
    biases_vh,
    *,
    compute_dtype=jnp.bfloat16,
    out_dtype=None,
    tm=None,
    tn=None,
    tk=None,
):
    """x_bvd: [B, V, D]; weights: [V, D, H]; biases: [V, H] -> [B, H]."""
    B, V, D = x_bvd.shape
    _, _, H = weights_vdh.shape
    K = V * D
    inv_v = 1.0 / float(V)
    out_dtype = out_dtype or x_bvd.dtype

    # Collapse the V-member ensemble into a single matmul (free reshapes).
    x2 = x_bvd.reshape(B, K)
    w2 = weights_vdh.reshape(K, H)
    b_mean = jnp.mean(biases_vh.astype(jnp.float32), axis=0).reshape(1, H)

    # Feed the MXU bf16 (f32 accumulation stays inside the kernel).
    if x2.dtype != compute_dtype:
        x2 = x2.astype(compute_dtype)
    if w2.dtype != compute_dtype:
        w2 = w2.astype(compute_dtype)

    # ---- tile selection (lane=128 / sublane=8 aligned, sized for the MXU) ----
    if tm is None:
        tm = 256 if B >= 256 else _round_up(max(B, 1), 8)
    Bp = _round_up(B, tm)

    if tn is None:
        tn = 512 if H >= 512 else (256 if H >= 256 else 128)
        # v7x has 2 TensorCores; "parallel" grid axes shard across them.  If the
        # whole output is a single (i, j) block, split N so both cores get work.
        if Bp // tm == 1 and _round_up(H, tn) // tn == 1 and tn >= 256:
            tn //= 2
    Hp = _round_up(H, tn)

    # K must be padded when not 128-aligned (reduction-axis padding is
    # load-bearing); otherwise pick tk that exactly divides it -> no K padding.
    Kp = _round_up(K, 128)
    if tk is None:
        if Kp <= 1024:
            tk = Kp
        else:
            tk = next(c for c in (1024, 512, 256, 128) if Kp % c == 0)

    # ---- padding (only when actually unaligned) ----
    if (Bp, Kp) != (B, K):
        x2 = jnp.pad(x2, ((0, Bp - B), (0, Kp - K)))
    if (Kp, Hp) != (K, H):
        w2 = jnp.pad(w2, ((0, Kp - K), (0, Hp - H)))
    if Hp != H:
        b_mean = jnp.pad(b_mean, ((0, 0), (0, Hp - H)))

    grid = (Bp // tm, Hp // tn, Kp // tk)

    # ---- VMEM budget (double-buffered inputs + output tile + f32 scratch) ----
    in_bytes = jnp.dtype(compute_dtype).itemsize
    out_bytes = jnp.dtype(out_dtype).itemsize
    vmem_need = (
        2 * (tm * tk + tk * tn) * in_bytes  # double-buffered x / W tiles
        + 2 * tn * 4                        # double-buffered bias row (f32)
        + 2 * tm * tn * out_bytes           # double-buffered output tile
        + tm * tn * 4                       # f32 accumulator scratch
    )
    # Comfortably below 64 MiB physical on v7x and 16 MiB scoped default on v5e.
    vmem_limit = int(min(max(2 * vmem_need, 8 << 20), 32 << 20))

    cost = pl.CostEstimate(
        flops=2 * Bp * Kp * Hp,
        transcendentals=0,
        bytes_accessed=(Bp * Kp + Kp * Hp) * in_bytes + Bp * Hp * out_bytes + Hp * 4,
    )

    grid_spec = pltpu.PrefetchScalarGridSpec(
        num_scalar_prefetch=0,
        grid=grid,
        in_specs=[
            pl.BlockSpec((tm, tk), lambda i, j, k: (i, k)),
            pl.BlockSpec((tk, tn), lambda i, j, k: (k, j)),
            pl.BlockSpec((1, tn), lambda i, j, k: (0, j)),
        ],
        out_specs=pl.BlockSpec((tm, tn), lambda i, j, k: (i, j)),
        scratch_shapes=[pltpu.VMEM((tm, tn), jnp.float32)],
    )

    out_padded = pl.pallas_call(
        functools.partial(_ensemble_matmul_kernel, inv_v=inv_v),
        out_shape=jax.ShapeDtypeStruct((Bp, Hp), out_dtype),
        grid_spec=grid_spec,
        compiler_params=pltpu.CompilerParams(
            # B/H tiles are independent (megacore-parallel on v7x); K is the
            # innermost reduction axis.
            dimension_semantics=("parallel", "parallel", "arbitrary"),
            vmem_limit_bytes=vmem_limit,
        ),
        cost_estimate=cost,
    )(x2, w2, b_mean)

    if (Bp, Hp) != (B, H):
        return out_padded[:B, :H]
    return out_padded


def multi_view_reference(x_bvd, weights_vdh, biases_vh):
    # pure-JAX reference: mean over per-view linear heads (f32 throughout)
    per_view = jnp.einsum("bvd,vdh->vbh", x_bvd, weights_vdh) + biases_vh[:, None, :]
    return jnp.mean(per_view, axis=0)


def _check(B, V, D, H, seed):
    key = jax.random.PRNGKey(seed)
    kx, kw, kb = jax.random.split(key, 3)
    x = jax.random.normal(kx, (B, V, D), dtype=jnp.float32)
    w = jax.random.normal(kw, (V, D, H), dtype=jnp.float32) * 0.1
    b = jax.random.normal(kb, (V, H), dtype=jnp.float32) * 0.01

    fwd = jax.jit(multi_view_forward)
    out = jax.block_until_ready(fwd(x, w, b))
    ref = multi_view_reference(x, w, b)
    assert out.shape == (B, H)
    # bf16 MXU inputs with f32 accumulation -> loosened tolerance vs pure-f32
    assert jnp.allclose(out, ref, atol=5e-2, rtol=5e-2), (
        f"mismatch vs reference for shape B={B} V={V} D={D} H={H}: "
        f"max abs diff {jnp.max(jnp.abs(out - ref))}"
    )


if __name__ == "__main__":
    # primary small demo: (8,128)-aligned so no padding / no slice copy
    _check(B=8, V=4, D=32, H=128, seed=0)
    # unaligned small shapes exercise the zero-padding path in the wrapper
    _check(B=2, V=3, D=32, H=16, seed=1)
    print("KERNEL_OK")
</pallas_src>

<mosaic_0001>
module attributes {stable_mosaic.version = 11 : i64} {
  func.func @_ensemble_matmul_kernel(%arg0: i32, %arg1: i32, %arg2: i32, %arg3: memref<8x128xbf16, #tpu.memory_space<vmem>>, %arg4: memref<128x128xbf16, #tpu.memory_space<vmem>>, %arg5: memref<1x128xf32, #tpu.memory_space<vmem>>, %arg6: memref<8x128xf32, #tpu.memory_space<vmem>>, %arg7: memref<8x128xf32, #tpu.memory_space<vmem>>) attributes {dimension_semantics = [#tpu.dimension_semantics<parallel>, #tpu.dimension_semantics<parallel>, #tpu.dimension_semantics<arbitrary>], iteration_bounds = array<i64: 1, 1, 1>, scalar_prefetch = 0 : i64, scratch_operands = 1 : i64, tpu.core_type = #tpu.core_type<tc>, window_params = [{transform_indices = @transform_0, window_bounds = array<i64: 8, 128>}, {transform_indices = @transform_1, window_bounds = array<i64: 128, 128>}, {transform_indices = @transform_2, window_bounds = array<i64: 1, 128>}, {transform_indices = @transform_3, window_bounds = array<i64: 8, 128>}]} {
    %c0_i32 = arith.constant 0 : i32
    %0 = arith.cmpi eq, %arg2, %c0_i32 : i32
    %1 = arith.extui %0 : i1 to i32
    %c0_i32_0 = arith.constant 0 : i32
    %2 = arith.cmpi ne, %1, %c0_i32_0 : i32
    scf.if %2 {
      %cst_10 = arith.constant 0.000000e+00 : f32
      %12 = vector.broadcast %cst_10 : f32 to vector<8x128xf32>
      %c0_11 = arith.constant 0 : index
      %c0_12 = arith.constant 0 : index
      %13 = vector.load %arg7[%c0_11, %c0_12] : memref<8x128xf32, #tpu.memory_space<vmem>>, vector<8x128xf32>
      tpu.vector_store %arg7[%c0_11, %c0_12], %12 {strides = array<i32>} : memref<8x128xf32, #tpu.memory_space<vmem>>, vector<8x128xf32>,
    } else {
    }
    %c0 = arith.constant 0 : index
    %c0_1 = arith.constant 0 : index
    %3 = vector.load %arg7[%c0, %c0_1] : memref<8x128xf32, #tpu.memory_space<vmem>>, vector<8x128xf32>
    %c0_2 = arith.constant 0 : index
    %c0_3 = arith.constant 0 : index
    %4 = vector.load %arg3[%c0_2, %c0_3] : memref<8x128xbf16, #tpu.memory_space<vmem>>, vector<8x128xbf16>
    %c0_4 = arith.constant 0 : index
    %c0_5 = arith.constant 0 : index
    %5 = vector.load %arg4[%c0_4, %c0_5] : memref<128x128xbf16, #tpu.memory_space<vmem>>, vector<128x128xbf16>
    %cst = arith.constant dense<0.000000e+00> : vector<8x128xf32>
    %6 = tpu.matmul %4, %5, %cst {dimension_numbers = #tpu.dot_dimension_numbers<[1], [0], [0], [1], [0, 0, 1, 1], [], []>} : vector<8x128xbf16>, vector<128x128xbf16>, vector<8x128xf32> -> vector<8x128xf32>
    %7 = arith.addf %3, %6 : vector<8x128xf32>
    %c0_6 = arith.constant 0 : index
    %c0_7 = arith.constant 0 : index
    %8 = vector.load %arg7[%c0_6, %c0_7] : memref<8x128xf32, #tpu.memory_space<vmem>>, vector<8x128xf32>
    tpu.vector_store %arg7[%c0_6, %c0_7], %7 {strides = array<i32>} : memref<8x128xf32, #tpu.memory_space<vmem>>, vector<8x128xf32>,
    %c0_i32_8 = arith.constant 0 : i32
    %9 = arith.cmpi eq, %arg2, %c0_i32_8 : i32
    %10 = arith.extui %9 : i1 to i32
    %c0_i32_9 = arith.constant 0 : i32
    %11 = arith.cmpi ne, %10, %c0_i32_9 : i32
    scf.if %11 {
      %c0_10 = arith.constant 0 : index
      %c0_11 = arith.constant 0 : index
      %12 = vector.load %arg7[%c0_10, %c0_11] : memref<8x128xf32, #tpu.memory_space<vmem>>, vector<8x128xf32>
      %cst_12 = arith.constant 2.500000e-01 : f32
      %13 = vector.broadcast %cst_12 : f32 to vector<8x128xf32>
      %14 = arith.mulf %12, %13 : vector<8x128xf32>
      %c0_13 = arith.constant 0 : index
      %c0_14 = arith.constant 0 : index
      %15 = vector.load %arg5[%c0_13, %c0_14] : memref<1x128xf32, #tpu.memory_space<vmem>>, vector<1x128xf32>
      %16 = vector.broadcast %15 : vector<1x128xf32> to vector<8x128xf32>
      %17 = arith.addf %14, %16 : vector<8x128xf32>
      %c0_15 = arith.constant 0 : index
      %c0_16 = arith.constant 0 : index
      %18 = vector.load %arg6[%c0_15, %c0_16] : memref<8x128xf32, #tpu.memory_space<vmem>>, vector<8x128xf32>
      tpu.vector_store %arg6[%c0_15, %c0_16], %17 {strides = array<i32>} : memref<8x128xf32, #tpu.memory_space<vmem>>, vector<8x128xf32>,
    } else {
    }
    return
  }
  func.func @transform_0(%arg0: i32, %arg1: i32, %arg2: i32) -> (i32, i32) {
    %c0_i32 = arith.constant 0 : i32
    return %arg0, %arg2 : i32, i32
  }
  func.func @transform_1(%arg0: i32, %arg1: i32, %arg2: i32) -> (i32, i32) {
    %c0_i32 = arith.constant 0 : i32
    return %arg2, %arg1 : i32, i32
  }
  func.func @transform_2(%arg0: i32, %arg1: i32, %arg2: i32) -> (i32, i32) {
    %c0_i32 = arith.constant 0 : i32
    %c0_i32_0 = arith.constant 0 : i32
    return %c0_i32, %arg1 : i32, i32
  }
  func.func @transform_3(%arg0: i32, %arg1: i32, %arg2: i32) -> (i32, i32) {
    %c0_i32 = arith.constant 0 : i32
    return %arg0, %arg1 : i32, i32
  }
}

</mosaic_0001>

<llo_original>
// kernel: multi_view_forward.1
$region0: #{multi_view_forward.1}
  #allocation0 [shape = 'u32[]', space=smem, size = 0x4, offset = 0x4, fixed_abs, tag = 'smem constant byte address 0x4 - core index']
  #allocation1 [shape = 'u32[144,128]{1,0:T(1,128)}', space=vmem, size = 0x12000, scoped, tag = 'internal scratch']
  #allocation2 [shape = 'f32[8,128]{1,0:T(8,128)}', space=vmem, size = 0x1000, scoped, tag = 'scratch operand']
  %s0 = inlined_call_operand.vmem [shape: bf16[8,128], index: 0, kind: input, shape index: {}]
  %s1 = inlined_call_operand.vmem [shape: bf16[128,128], index: 1, kind: input, shape index: {}]
  %s2 = inlined_call_operand.vmem [shape: f32[1,128], index: 2, kind: input, shape index: {}]
  %s3 = inlined_call_operand.hbm [shape: f32[8,128], index: 3, kind: output, shape index: {}]
  %s4 = sld [smem:[#allocation0]]
  $region30: #{multi_view_forward.1} parent=0
    _
  %s6 = ssub.s32 1, %s4
  %s7 = scalar_select 0, %s6, %s4
  $region1: #{multi_view_forward.1} parent=0
    #allocation3 [shape = 'u8[4096]{0}', space=vmem, size = 0x1000, scoped, tag = 'output window, operand 0, single buffered']
    #allocation4 [shape = 's32[1]{0}', space=sflag, size = 0x4, scoped, tag = 'scoped memory for multi_view_forward.1']
    %8 = vsyncpa [#allocation4], 0
    // Predicated region
    $region2: #{multi_view_forward.1} parent=1 // pred_check
      _
    $region3: #{multi_view_forward.1} parent=1 // pred_check_branch
      %10 = sbr.rel (0) target = $region5
    $region4: #{multi_view_forward.1} parent=1 // pred_region
      _
    $region5: #{multi_view_forward.1} parent=1 // pred_fallthru
      _
    // Predicated region
    $region6: #{multi_view_forward.1} parent=1 // pred_check
      _
    $region7: #{multi_view_forward.1} parent=1 // pred_check_branch
      %12 = sbr.rel (0) target = $region9
    $region8: #{multi_view_forward.1} parent=1 // pred_region
      _
    $region9: #{multi_view_forward.1} parent=1 // pred_fallthru
      _
    // Predicated region
    $region10: #{multi_view_forward.1} parent=1 // pred_check
      _
    $region11: #{multi_view_forward.1} parent=1 // pred_check_branch
      %14 = sbr.rel (0) target = $region13
    $region12: #{multi_view_forward.1} parent=1 // pred_region
      _
    $region13: #{multi_view_forward.1} parent=1 // pred_fallthru
      _
    %p16 = scmp.eq.s32.totalorder 0, 0
    // Predicated region
    $region14: #{multi_view_forward.1} parent=1 // pred_check
      %p17 = pneg %p16
    $region15: #{multi_view_forward.1} parent=1 // pred_check_branch
      %19 = sbr.rel (%p17) target = $region17
    $region16: #{multi_view_forward.1} parent=1 // pred_region
      %20 = vst [vmem:[#allocation2] sm:$0xff] 0.0
    $region17: #{multi_view_forward.1} parent=1 // pred_fallthru
      _
    %v21 = vld [vmem:[#allocation2] sm:$0xff]
    %v22 = vld [vmem:[%s0] sm:$0xf]
    %v23 = vld [vmem:[%s1] sm:$0xf]
    %v24 = vld [vmem:[%s1 + $0x4] sm:$0xf]
    %v25 = vld [vmem:[%s1 + $0x8] sm:$0xf]
    %v26 = vld [vmem:[%s1 + $0xc] sm:$0xf]
    %v27 = vld [vmem:[%s1 + $0x10] sm:$0xf]
    %v28 = vld [vmem:[%s1 + $0x14] sm:$0xf]
    %v29 = vld [vmem:[%s1 + $0x18] sm:$0xf]
    %v30 = vld [vmem:[%s1 + $0x1c] sm:$0xf]
    %v31 = vld [vmem:[%s1 + $0x20] sm:$0xf]
    %v32 = vld [vmem:[%s1 + $0x24] sm:$0xf]
    %v33 = vld [vmem:[%s1 + $0x28] sm:$0xf]
    %v34 = vld [vmem:[%s1 + $0x2c] sm:$0xf]
    %v35 = vld [vmem:[%s1 + $0x30] sm:$0xf]
    %v36 = vld [vmem:[%s1 + $0x34] sm:$0xf]
    %v37 = vld [vmem:[%s1 + $0x38] sm:$0xf]
    %v38 = vld [vmem:[%s1 + $0x3c] sm:$0xf]
    %v55 = vunpack.c.l.b16 %v23
    %v56 = vunpack.c.l.b16 %v24
    %v57 = vunpack.c.l.b16 %v25
    %v58 = vunpack.c.l.b16 %v26
    %v59 = vunpack.c.l.b16 %v27
    %v60 = vunpack.c.l.b16 %v28
    %v61 = vunpack.c.l.b16 %v29
    %v62 = vunpack.c.l.b16 %v30
    %v63 = vunpack.c.l.b16 %v31
    %v64 = vunpack.c.l.b16 %v32
    %v65 = vunpack.c.l.b16 %v33
    %v66 = vunpack.c.l.b16 %v34
    %v67 = vunpack.c.l.b16 %v35
    %v68 = vunpack.c.l.b16 %v36
    %v69 = vunpack.c.l.b16 %v37
    %v70 = vunpack.c.l.b16 %v38
    %v71 = vpack.c.b16 %v56, %v55
    %v72 = vpack.c.b16 %v58, %v57
    %v73 = vpack.c.b16 %v60, %v59
    %v74 = vpack.c.b16 %v62, %v61
    %v75 = vpack.c.b16 %v64, %v63
    %v76 = vpack.c.b16 %v66, %v65
    %v77 = vpack.c.b16 %v68, %v67
    %v78 = vpack.c.b16 %v70, %v69
    %87 = vmatprep.subr.bf16.mxu0 0
    %88 = vmatpush1.bf16.msra.mxu0 %v71
    %89 = vmatprep.subr.bf16.mxu0 0
    %90 = vmatpush1.bf16.msra.mxu0 %v72
    %91 = vmatprep.subr.bf16.mxu0 0
    %92 = vmatpush1.bf16.msra.mxu0 %v73
    %93 = vmatprep.subr.bf16.mxu0 0
    %94 = vmatpush1.bf16.msra.mxu0 %v74
    %95 = vmatprep.subr.bf16.mxu0 0
    %96 = vmatpush1.bf16.msra.mxu0 %v75
    %97 = vmatprep.subr.bf16.mxu0 0
    %98 = vmatpush1.bf16.msra.mxu0 %v76
    %99 = vmatprep.subr.bf16.mxu0 0
    %100 = vmatpush1.bf16.msra.mxu0 %v77
    %101 = vmatprep.subr.bf16.mxu0 0
    %102 = vmatpush1.bf16.msra.mxu0 %v78
    %103 = vmatprep.subr.bf16.mxu0 0
    %104 = vmatpush1.bf16.msra.mxu0 0
    %105 = vmatprep.subr.bf16.mxu0 0
    %106 = vmatpush1.bf16.msra.mxu0 0
    %107 = vmatprep.subr.bf16.mxu0 0
    %108 = vmatpush1.bf16.msra.mxu0 0
    %109 = vmatprep.subr.bf16.mxu0 0
    %110 = vmatpush1.bf16.msra.mxu0 0
    %111 = vmatprep.subr.bf16.mxu0 0
    %112 = vmatpush1.bf16.msra.mxu0 0
    %113 = vmatprep.subr.bf16.mxu0 0
    %114 = vmatpush1.bf16.msra.mxu0 0
    %115 = vmatprep.subr.bf16.mxu0 0
    %116 = vmatpush1.bf16.msra.mxu0 0
    %117 = vmatprep.subr.bf16.mxu0 0
    %118 = vmatpush1.bf16.msra.mxu0 0
    %119 = vmatprep.mubr.bf16.mxu0 0
    %120 = vmatmul.mubr.bf16.gmra.mrb[0].mxu0 %v22
    %v121 = vpop.f32.mrb[0].mxu0
    %v122 = vadd.f32 0.0, %v121
    %v123 = vpop.f32.mrb[0].mxu0
    %v124 = vpop.f32.mrb[0].mxu0
    %v125 = vpop.f32.mrb[0].mxu0
    %126 = vdwg.mxu0
    %v127 = vadd.f32 %v21, %v122
    %128 = vst [vmem:[#allocation2] sm:$0xff] %v127
    // Predicated region
    $region18: #{multi_view_forward.1} parent=1 // pred_check
      %p129 = pneg %p16
    $region19: #{multi_view_forward.1} parent=1 // pred_check_branch
      %131 = sbr.rel (%p129) target = $region21
    $region20: #{multi_view_forward.1} parent=1 // pred_region
      %v132 = vld [vmem:[#allocation2] sm:$0xff]
      %v133 = vmul.f32 %v132, 0.25
      %v134 = vld [vmem:[%s2] sm:$0x1]
      %v136 = vlaneseq
      %v137 = vshrl.u32 %v136, 7
      %v138 = vsub.s32 0, %v137
      %v139 = vrot.slane %v134, %v138
      %v141 = vadd.f32 %v133, %v139
      %142 = vst [vmem:[#allocation3] sm:$0xff] %v141
    $region21: #{multi_view_forward.1} parent=1 // pred_fallthru
      _
    // Predicated region
    $region22: #{multi_view_forward.1} parent=1 // pred_check
      _
    $region23: #{multi_view_forward.1} parent=1 // pred_check_branch
      %144 = sbr.rel (0) target = $region25
    $region24: #{multi_view_forward.1} parent=1 // pred_region
      %s146 = ssub.s32 128, 128
      %147 = vsyncadd [#allocation4], %s146
      %s149 = sshll.u32 [#allocation3], 4
      %s150 = int_to_ptr.vmem [resolvable:$true] %s149
      %152 = dma.vmem_to_hbm [thread:$0]  %s150, 128, %s3, [#allocation4]
    $region25: #{multi_view_forward.1} parent=1 // pred_fallthru
      _
    // Predicated region
    $region26: #{multi_view_forward.1} parent=1 // pred_check
      _
    $region27: #{multi_view_forward.1} parent=1 // pred_check_branch
      %154 = sbr.rel (0) target = $region29
    $region28: #{multi_view_forward.1} parent=1 // pred_region
      %155 = dma.done [#allocation4], 128
    $region29: #{multi_view_forward.1} parent=1 // pred_fallthru
      _
    %156 = vsyncpa [#allocation4], 1

</llo_original>
